<compile_context>
chip_gen: v5e
topology: v5e:2x2
jax: 0.10.0
libtpu: 0.0.40
codegen_flags: <defaults>
</compile_context>

<pallas_src>
import jax
import jax.numpy as jnp
from jax.experimental import pallas as pl
from jax.experimental.pallas import tpu as pltpu


def _round_up(n, m):
    return ((n + m - 1) // m) * m


def _cdiv(a, b):
    return -(-a // b)


def _vmem_capacity_bytes(default=64 * 1024 * 1024):
    """Physical VMEM of the local chip; conservative (v7x-sized) fallback."""
    try:
        info = pltpu.get_tpu_info()
        for name in ("vmem_capacity_bytes", "vmem_size_bytes", "vmem_bytes"):
            cap = getattr(info, name, None)
            if cap:
                return int(cap)
    except Exception:
        pass
    return default


def _single_step_kernel(x_ref, w_ref, o_ref):
    # x_ref: (TM, D) streamed; w_ref: (1, D) resident; o_ref: (TM, 1).
    xw = x_ref[...].astype(jnp.float32) * w_ref[...].astype(jnp.float32)
    o_ref[...] = jnp.sum(xw, axis=-1, keepdims=True).astype(o_ref.dtype)


def _make_tiled_kernel(tm, tk, d):
    d_rem = d % tk

    def kernel(x_ref, w_ref, o_ref, acc_ref):
        # x_ref: (TM, TK) streamed; w_ref: (1, D_pad) resident; o_ref: (TM, 1);
        # acc_ref: (TM, 128) f32 partials (lane reduce deferred to finalize).
        k = pl.program_id(1)

        @pl.when(k == 0)
        def _init():
            acc_ref[...] = jnp.zeros_like(acc_ref)

        off = pl.multiple_of(k * tk, 128)
        x = x_ref[...].astype(jnp.float32)
        w = w_ref[:, pl.ds(off, tk)].astype(jnp.float32)
        xw = x * w
        if d_rem != 0:
            # Ragged last K tile: x's OOB lanes are unspecified (may be NaN),
            # so zero them before accumulating. For k < last the mask is all-true.
            lane = jax.lax.broadcasted_iota(jnp.int32, (tm, tk), 1)
            xw = jnp.where(lane < (d - k * tk), xw, 0.0)

        # VPU-only adds of 128-lane partials; single XLU reduce in finalize.
        partial = xw[:, 0:128]
        for c in range(1, tk // 128):
            partial = partial + xw[:, c * 128:(c + 1) * 128]
        acc_ref[...] += partial

        @pl.when(k == pl.num_programs(1) - 1)
        def _finalize():
            o_ref[...] = jnp.sum(
                acc_ref[...], axis=-1, keepdims=True).astype(o_ref.dtype)

    return kernel


def linear_net_forward(x, w, *, tm_max=1024, tk_max=8192, out_dtype=None):
    """Forward pass of LinearNet: x @ w.T (no bias), shape (batch, 1)."""
    assert x.ndim == 2, f"x must be (batch, n_inputs), got {x.shape}"
    B, D = x.shape
    assert w.shape == (1, D), f"weight must be (1, {D}), got {w.shape}"
    out_dtype = x.dtype if out_dtype is None else out_dtype

    itemsize = jnp.dtype(x.dtype).itemsize
    sub = 8 if itemsize >= 4 else (16 if itemsize == 2 else 32)
    tm_max = _round_up(tm_max, sub)

    # VMEM budget: scoped limit = 3/4 of physical capacity; the double-buffered
    # x tile gets half of the limit, leaving the rest for w / acc / out / slack.
    vmem_limit = min(_vmem_capacity_bytes() * 3 // 4, 96 * 1024 * 1024)
    x_tile_budget = vmem_limit // 4

    # ---- batch (sublane) tiling: keep >= 2 "parallel" blocks for v7x megacore.
    if B > tm_max:
        TM = tm_max
    elif B >= 2 * sub:
        TM = _round_up(_cdiv(B, 2), sub)
    else:
        TM = _round_up(B, sub)
    num_b = _cdiv(B, TM)
    B_pad = num_b * TM

    out_shape = jax.ShapeDtypeStruct((B_pad, 1), out_dtype)
    cost = pl.CostEstimate(
        flops=2 * B * D,
        transcendentals=0,
        bytes_accessed=itemsize * B * D + jnp.dtype(w.dtype).itemsize * D
        + jnp.dtype(out_dtype).itemsize * B,
    )

    single_step = (D <= tk_max) and (TM * D * itemsize <= x_tile_budget)

    if single_step:
        # TK == D exactly: no accumulator, no padding, no masking.
        out = pl.pallas_call(
            _single_step_kernel,
            out_shape=out_shape,
            grid=(num_b,),
            in_specs=[
                pl.BlockSpec((TM, D), lambda i: (i, 0)),   # x tiles stream in
                pl.BlockSpec((1, D), lambda i: (0, 0)),    # w resident
            ],
            out_specs=pl.BlockSpec((TM, 1), lambda i: (i, 0)),
            compiler_params=pltpu.CompilerParams(
                dimension_semantics=("parallel",),
                vmem_limit_bytes=vmem_limit,
            ),
            cost_estimate=cost,
        )(x, w)
        return out[:B]

    # ---- K-tiled path (very large D): reduction axis last, f32 accumulator.
    TK = max(128, (min(tk_max, x_tile_budget // (TM * itemsize)) // 128) * 128)
    n_k = _cdiv(D, TK)
    D_pad = n_k * TK
    # Only the tiny weight is padded (keeps the resident in-kernel slice in
    # bounds); x is never padded — its ragged last tile is masked in-kernel.
    if D_pad != D:
        w = jnp.pad(w, ((0, 0), (0, D_pad - D)))

    kernel = _make_tiled_kernel(TM, TK, D)
    out = pl.pallas_call(
        kernel,
        out_shape=out_shape,
        grid=(num_b, n_k),
        in_specs=[
            pl.BlockSpec((TM, TK), lambda i, k: (i, k)),    # x tiles stream in
            pl.BlockSpec((1, D_pad), lambda i, k: (0, 0)),  # w fully resident
        ],
        out_specs=pl.BlockSpec((TM, 1), lambda i, k: (i, 0)),
        scratch_shapes=[pltpu.VMEM((TM, 128), jnp.float32)],
        compiler_params=pltpu.CompilerParams(
            dimension_semantics=("parallel", "arbitrary"),
            vmem_limit_bytes=vmem_limit,
        ),
        cost_estimate=cost,
    )(x, w)
    return out[:B]


if __name__ == "__main__":
    key = jax.random.PRNGKey(0)
    kx, kw, kx2, kw2, kx3, kw3 = jax.random.split(key, 6)

    # --- small shape consistent with the module: batch=8, n_inputs=32 ---
    B, D = 8, 32
    x = jax.random.normal(kx, (B, D), dtype=jnp.float32)
    bound = 1.0 / jnp.sqrt(jnp.float32(D))
    w = jax.random.uniform(kw, (1, D), dtype=jnp.float32, minval=-bound, maxval=bound)
    out = linear_net_forward(x, w)
    jax.block_until_ready(out)
    ref = (x * w).sum(-1, keepdims=True)
    assert out.shape == (B, 1)
    assert jnp.allclose(out, ref, atol=1e-5, rtol=1e-5), "small-shape mismatch"

    # --- ragged multi-block batch, single-K-step path (no padding anywhere) ---
    B2, D2 = 777, 2500
    x2 = jax.random.normal(kx2, (B2, D2), dtype=jnp.float32)
    bound2 = 1.0 / jnp.sqrt(jnp.float32(D2))
    w2 = jax.random.uniform(kw2, (1, D2), dtype=jnp.float32, minval=-bound2, maxval=bound2)
    out2 = linear_net_forward(x2, w2)
    jax.block_until_ready(out2)
    ref2 = (x2 * w2).sum(-1, keepdims=True)
    assert out2.shape == (B2, 1)
    assert jnp.allclose(out2, ref2, atol=1e-4, rtol=1e-4), "single-step path mismatch"

    # --- force the K-tiled path (masked ragged last K tile + f32 accumulator) ---
    B3, D3 = 300, 2500
    x3 = jax.random.normal(kx3, (B3, D3), dtype=jnp.float32)
    bound3 = 1.0 / jnp.sqrt(jnp.float32(D3))
    w3 = jax.random.uniform(kw3, (1, D3), dtype=jnp.float32, minval=-bound3, maxval=bound3)
    out3 = linear_net_forward(x3, w3, tm_max=128, tk_max=1024)
    jax.block_until_ready(out3)
    ref3 = (x3 * w3).sum(-1, keepdims=True)
    assert out3.shape == (B3, 1)
    assert jnp.allclose(out3, ref3, atol=1e-4, rtol=1e-4), "K-tiled path mismatch"

    print("KERNEL_OK")
</pallas_src>

<mosaic_0001>
module attributes {stable_mosaic.version = 11 : i64} {
  func.func @_single_step_kernel(%arg0: i32, %arg1: memref<8x32xf32, #tpu.memory_space<vmem>>, %arg2: memref<1x32xf32, #tpu.memory_space<vmem>>, %arg3: memref<8x1xf32, #tpu.memory_space<vmem>>) attributes {dimension_semantics = [#tpu.dimension_semantics<parallel>], iteration_bounds = array<i64: 1>, scalar_prefetch = 0 : i64, scratch_operands = 0 : i64, tpu.core_type = #tpu.core_type<tc>, window_params = [{transform_indices = @transform_0, window_bounds = array<i64: 8, 32>}, {pipeline_mode = #tpu.pipeline_mode<synchronous>, transform_indices = @transform_1, window_bounds = array<i64: 1, 32>}, {transform_indices = @transform_2, window_bounds = array<i64: 8, 1>}]} {
    %c0 = arith.constant 0 : index
    %c0_0 = arith.constant 0 : index
    %0 = vector.load %arg1[%c0, %c0_0] : memref<8x32xf32, #tpu.memory_space<vmem>>, vector<8x32xf32>
    %c0_1 = arith.constant 0 : index
    %c0_2 = arith.constant 0 : index
    %1 = vector.load %arg2[%c0_1, %c0_2] : memref<1x32xf32, #tpu.memory_space<vmem>>, vector<1x32xf32>
    %2 = vector.broadcast %1 : vector<1x32xf32> to vector<8x32xf32>
    %3 = arith.mulf %0, %2 : vector<8x32xf32>
    %cst = arith.constant dense<0.000000e+00> : vector<8xf32>
    %4 = vector.multi_reduction <add>, %3, %cst [1] : vector<8x32xf32> to vector<8xf32>
    %5 = vector.shape_cast %4 : vector<8xf32> to vector<8x1xf32>
    %c0_3 = arith.constant 0 : index
    %c0_4 = arith.constant 0 : index
    %6 = vector.load %arg3[%c0_3, %c0_4] : memref<8x1xf32, #tpu.memory_space<vmem>>, vector<8x1xf32>
    tpu.vector_store %arg3[%c0_3, %c0_4], %5 {strides = array<i32>} : memref<8x1xf32, #tpu.memory_space<vmem>>, vector<8x1xf32>,
    return
  }
  func.func @transform_0(%arg0: i32) -> (i32, i32) {
    %c0_i32 = arith.constant 0 : i32
    %c0_i32_0 = arith.constant 0 : i32
    return %arg0, %c0_i32 : i32, i32
  }
  func.func @transform_1(%arg0: i32) -> (i32, i32) {
    %c0_i32 = arith.constant 0 : i32
    %c0_i32_0 = arith.constant 0 : i32
    %c0_i32_1 = arith.constant 0 : i32
    return %c0_i32, %c0_i32_0 : i32, i32
  }
  func.func @transform_2(%arg0: i32) -> (i32, i32) {
    %c0_i32 = arith.constant 0 : i32
    %c0_i32_0 = arith.constant 0 : i32
    return %arg0, %c0_i32 : i32, i32
  }
}

</mosaic_0001>

<llo_original>
// kernel: tpu_custom_call.1
$region0: #{tpu_custom_call.1}
  #allocation0 [shape = 'u32[]', space=smem, size = 0x4, offset = 0x4, fixed_abs, tag = 'smem constant byte address 0x4 - core index']
  #allocation1 [shape = 'u32[72,128]{1,0:T(1,128)}', space=vmem, size = 0x9000, scoped, tag = 'internal scratch']
  %s0 = inlined_call_operand.hbm [shape: f32[8,32], index: 0, kind: input, shape index: {}]
  %s1 = inlined_call_operand.hbm [shape: f32[1,32], index: 1, kind: input, shape index: {}]
  %s2 = inlined_call_operand.vmem [shape: f32[8,1], index: 2, kind: output, shape index: {}]
  %s3 = sld [smem:[#allocation0]]
  $region26: #{tpu_custom_call.1} parent=0
    _
  %s5 = ssub.s32 1, %s3
  %s6 = scalar_select 0, %s5, %s3
  $region1: #{tpu_custom_call.1} parent=0
    #allocation2 [shape = 'u8[4096]{0}', space=vmem, size = 0x1000, scoped, tag = 'input window, operand 0, single buffered']
    #allocation3 [shape = 's32[1]{0}', space=sflag, size = 0x4, scoped, tag = 'scoped memory for tpu_custom_call.1']
    #allocation4 [shape = 'u8[512]{0}', space=vmem, size = 0x400, scoped, tag = 'input window, operand 1, single buffered']
    #allocation5 [shape = 's32[1]{0}', space=sflag, size = 0x4, scoped, tag = 'scoped memory for tpu_custom_call.1']
    %7 = vsyncpa [#allocation3], 0
    %8 = vsyncpa [#allocation5], 0
    // Predicated region
    $region2: #{tpu_custom_call.1} parent=1 // pred_check
      _
    $region3: #{tpu_custom_call.1} parent=1 // pred_check_branch
      %10 = sbr.rel (0) target = $region5
    $region4: #{tpu_custom_call.1} parent=1 // pred_region
      %12 = vsyncadd [#allocation3], 0
      %s14 = sshll.u32 %s0, 4
      %s15 = int_to_ptr.hbm [resolvable:$true] %s14
      %s16 = sshll.u32 [#allocation2], 4
      %s17 = int_to_ptr.vmem [resolvable:$true] %s16
      %19 = dma.hbm_to_vmem [thread:$0]  %s15, 128, %s17, [#allocation3]
    $region5: #{tpu_custom_call.1} parent=1 // pred_fallthru
      _
    // Predicated region
    $region6: #{tpu_custom_call.1} parent=1 // pred_check
      _
    $region7: #{tpu_custom_call.1} parent=1 // pred_check_branch
      %21 = sbr.rel (0) target = $region9
    $region8: #{tpu_custom_call.1} parent=1 // pred_region
      %23 = vsyncadd [#allocation5], 0
      %s25 = sshll.u32 %s1, 4
      %s26 = int_to_ptr.hbm [resolvable:$true] %s25
      %s27 = sshll.u32 [#allocation4], 4
      %s28 = int_to_ptr.vmem [resolvable:$true] %s27
      %30 = dma.hbm_to_vmem [thread:$0]  %s26, 16, %s28, [#allocation5]
    $region9: #{tpu_custom_call.1} parent=1 // pred_fallthru
      _
    // Predicated region
    $region10: #{tpu_custom_call.1} parent=1 // pred_check
      _
    $region11: #{tpu_custom_call.1} parent=1 // pred_check_branch
      %32 = sbr.rel (0) target = $region13
    $region12: #{tpu_custom_call.1} parent=1 // pred_region
      %34 = dma.done [#allocation3], 128
    $region13: #{tpu_custom_call.1} parent=1 // pred_fallthru
      _
    // Predicated region
    $region14: #{tpu_custom_call.1} parent=1 // pred_check
      _
    $region15: #{tpu_custom_call.1} parent=1 // pred_check_branch
      %36 = sbr.rel (0) target = $region17
    $region16: #{tpu_custom_call.1} parent=1 // pred_region
      %38 = dma.done [#allocation5], 16
    $region17: #{tpu_custom_call.1} parent=1 // pred_fallthru
      _
    %v39 = vld [vmem:[#allocation2] sm:$0xff]
    %v40 = vld [vmem:[#allocation4] sm:$0x1]
    %v42 = vperm.slane %v40, 0
    %v44 = vmul.f32 %v39, %v42
    %vm45 = vcmask 261120
    %v46 = vsel %vm45, %v44, 0.0
    %47 = vadd.xlane.f32.xlu0 %v46
    %v48 = vpop.xlane.xlu0 %47
    %vm49 = vcmask 7168
    %50 = vst.msk [vmem:[%s2] sm:$0xff] %vm49, %v48
    // Predicated region
    $region18: #{tpu_custom_call.1} parent=1 // pred_check
      _
    $region19: #{tpu_custom_call.1} parent=1 // pred_check_branch
      %52 = sbr.rel (0) target = $region21
    $region20: #{tpu_custom_call.1} parent=1 // pred_region
      _
    $region21: #{tpu_custom_call.1} parent=1 // pred_fallthru
      _
    // Predicated region
    $region22: #{tpu_custom_call.1} parent=1 // pred_check
      _
    $region23: #{tpu_custom_call.1} parent=1 // pred_check_branch
      %54 = sbr.rel (0) target = $region25
    $region24: #{tpu_custom_call.1} parent=1 // pred_region
      _
    $region25: #{tpu_custom_call.1} parent=1 // pred_fallthru
      _
    %55 = vsyncpa [#allocation3], 1
    %56 = vsyncpa [#allocation5], 1

</llo_original>
